<compile_context>
chip_gen: v5e
topology: v5e:2x2
jax: 0.10.0
libtpu: 0.0.40
codegen_flags: <defaults>
</compile_context>

<pallas_src>
import functools
import math

import jax
import jax.numpy as jnp
from jax.experimental import pallas as pl
from jax.experimental.pallas import tpu as pltpu


def mha_kernel(x_ref, wqkv_ref, wp_ref, bp_ref, gamma_ref, o_ref, *,
               num_heads, head_size):
    # x_ref:     (1, T, C)     f32  activations (one batch element per grid step)
    # wqkv_ref:  (C, 3*H*hs)   bf16 fused Q|K|V weights (softmax scale folded into Q)
    # wp_ref:    (H*hs, C)     bf16 output-projection weight (rows head-major)
    # bp_ref:    (1, C)        f32  output-projection bias
    # gamma_ref: (1, C)        f32  LayerNorm weight (bias=False)
    # o_ref:     (1, T, C)     f32  output
    _, T, C = x_ref.shape
    H, hs = num_heads, head_size
    HD = H * hs

    # ---- fused Q/K/V projection: one wide bf16 MXU matmul covering all heads ----
    x2 = x_ref[...].reshape(T, C).astype(jnp.bfloat16)
    qkv = jnp.dot(x2, wqkv_ref[...],
                  preferred_element_type=jnp.float32)           # (T, 3*HD) f32
    qkv = qkv.astype(jnp.bfloat16)

    def split_heads(m2d):
        # (T, HD) -> (H, T, hs): one layout change shared by every head.
        return jnp.transpose(m2d.reshape(T, H, hs), (1, 0, 2))

    q = split_heads(qkv[:, 0 * HD:1 * HD])   # 1/sqrt(hs) already folded into Wq
    k = split_heads(qkv[:, 1 * HD:2 * HD])
    v = split_heads(qkv[:, 2 * HD:3 * HD])

    # additive causal mask built once per grid step (finite sentinel -> NaN-safe)
    row = jax.lax.broadcasted_iota(jnp.int32, (T, T), 0)
    col = jax.lax.broadcasted_iota(jnp.int32, (T, T), 1)
    mask_add = jnp.where(col <= row, 0.0, -1e30).astype(jnp.float32)[None]  # (1,T,T)

    # ---- all heads in one batched QK^T einsum ----
    s = jnp.einsum('hqd,hkd->hqk', q, k,
                   preferred_element_type=jnp.float32)          # (H, T, T) f32
    s = s + mask_add

    # softmax (f32), normalization deferred until after PV
    m = jnp.max(s, axis=-1, keepdims=True)
    p = jnp.exp(s - m)                                          # un-normalized probs
    l = jnp.sum(p, axis=-1, keepdims=True)                      # (H, T, 1)
    # dropout(p=0.2) on attention weights: identity in eval mode

    o = jnp.einsum('hqk,hkd->hqd', p.astype(jnp.bfloat16), v,
                   preferred_element_type=jnp.float32)          # (H, T, hs) f32
    # normalize the (T, hs) output instead of the (T, T) probs; EUP reciprocal
    o = o * pl.reciprocal(l, approx=True)

    # ---- "concat + output projection" as ONE full-depth matmul ----
    cat = jnp.transpose(o, (1, 0, 2)).reshape(T, HD).astype(jnp.bfloat16)   # (T, HD)
    proj = jnp.dot(cat, wp_ref[...],
                   preferred_element_type=jnp.float32) + bp_ref[...]        # (T, C)
    # dropout(p=0.2) after projection: identity in eval mode

    # ---- LayerNorm over last dim, eps=1e-5, no bias (f32 elementwise) ----
    mean = jnp.mean(proj, axis=-1, keepdims=True)
    var = jnp.mean(jnp.square(proj - mean), axis=-1, keepdims=True)
    normed = (proj - mean) * jax.lax.rsqrt(var + 1e-5) * gamma_ref[...]

    o_ref[...] = normed.reshape(1, T, C).astype(o_ref.dtype)


def prepare_weights(wq, wk, wv, wp, bp, gamma):
    """One-time weight prep (outside the per-call path).

    wq/wk/wv: (H, C, hs); wp: (H*hs, C); bp, gamma: (C,).
    Returns (wqkv (C,3*H*hs) bf16 with scale folded into Q, wp bf16, bp f32, gamma f32).
    """
    H, C, hs = wq.shape
    HD = H * hs
    scale = hs ** (-0.5)
    wq_t = jnp.transpose(wq * scale, (1, 0, 2)).reshape(C, HD)
    wk_t = jnp.transpose(wk, (1, 0, 2)).reshape(C, HD)
    wv_t = jnp.transpose(wv, (1, 0, 2)).reshape(C, HD)
    wqkv = jnp.concatenate([wq_t, wk_t, wv_t], axis=-1).astype(jnp.bfloat16)
    return (wqkv,
            wp.astype(jnp.bfloat16),
            bp.reshape(1, C).astype(jnp.float32),
            gamma.reshape(1, C).astype(jnp.float32))


@functools.partial(jax.jit, static_argnames=("num_heads", "head_size"))
def multi_head_attention(x, wqkv, wp, bp, gamma, *, num_heads, head_size):
    """x: (B, T, C) f32; weights from prepare_weights()."""
    B, T, C = x.shape
    HD = num_heads * head_size
    kernel = functools.partial(mha_kernel, num_heads=num_heads, head_size=head_size)

    return pl.pallas_call(
        kernel,
        out_shape=jax.ShapeDtypeStruct((B, T, C), jnp.float32),
        grid=(B,),
        in_specs=[
            pl.BlockSpec((1, T, C), lambda b: (b, 0, 0)),        # per-batch activation tile
            pl.BlockSpec((C, 3 * HD), lambda b: (0, 0)),         # fused QKV weight (resident)
            pl.BlockSpec((HD, C), lambda b: (0, 0)),             # output-proj weight (resident)
            pl.BlockSpec((1, C), lambda b: (0, 0)),              # proj bias
            pl.BlockSpec((1, C), lambda b: (0, 0)),              # LayerNorm weight
        ],
        out_specs=pl.BlockSpec((1, T, C), lambda b: (b, 0, 0)),
        compiler_params=pltpu.CompilerParams(
            # batch axis is independent -> shard across TensorCores (v7x megacore)
            dimension_semantics=("parallel",),
            # explicit scoped-VMEM budget; per-step usage is a few MiB even at
            # the module's real config (T=256, C=384, H=6), safe on v7x's 64 MiB.
            vmem_limit_bytes=48 * 1024 * 1024),
    )(x, wqkv, wp, bp, gamma)


def reference(x, wq, wk, wv, wp, bp, gamma):
    """Plain-JAX f32 reference matching the PyTorch forward (eval mode)."""
    B, T, C = x.shape
    H, _, hs = wq.shape
    scale = hs ** (-0.5)
    mask = jnp.tril(jnp.ones((T, T), dtype=bool))
    outs = []
    for h in range(H):
        q = x @ wq[h]
        k = x @ wk[h]
        v = x @ wv[h]
        wei = (q @ jnp.swapaxes(k, -2, -1)) * scale
        wei = jnp.where(mask, wei, -jnp.inf)
        wei = jax.nn.softmax(wei, axis=-1)
        outs.append(wei @ v)
    cat = jnp.concatenate(outs, axis=-1)
    proj = cat @ wp + bp
    mean = jnp.mean(proj, axis=-1, keepdims=True)
    var = jnp.mean((proj - mean) ** 2, axis=-1, keepdims=True)
    return (proj - mean) * jax.lax.rsqrt(var + 1e-5) * gamma


if __name__ == "__main__":
    # Small shapes consistent with the module (n_embd scaled down from 384).
    B, T = 2, 8
    n_embd = 32
    num_heads = 4
    head_size = 8          # head_size * num_heads == n_embd

    key = jax.random.PRNGKey(0)
    kx, kq, kk, kv, kp, kb = jax.random.split(key, 6)

    x = jax.random.normal(kx, (B, T, n_embd), dtype=jnp.float32)

    # Head projection weights: normal(mean=0, std=0.01), no bias.
    # Stored pre-transposed as (H, n_embd, head_size).
    wq = 0.01 * jax.random.normal(kq, (num_heads, n_embd, head_size), jnp.float32)
    wk = 0.01 * jax.random.normal(kk, (num_heads, n_embd, head_size), jnp.float32)
    wv = 0.01 * jax.random.normal(kv, (num_heads, n_embd, head_size), jnp.float32)

    # Output projection: weight normal(std=0.01) (pre-transposed to (H*hs, n_embd)),
    # bias keeps nn.Linear's default uniform(-1/sqrt(fan_in), 1/sqrt(fan_in)) init.
    wp = 0.01 * jax.random.normal(kp, (num_heads * head_size, n_embd), jnp.float32)
    bound = 1.0 / math.sqrt(num_heads * head_size)
    bp = jax.random.uniform(kb, (n_embd,), jnp.float32, -bound, bound)

    gamma = jnp.ones((n_embd,), dtype=jnp.float32)  # LayerNorm weight, bias=False

    # Weight prep happens ONCE (not per forward call).
    wqkv, wp_b, bp_b, gamma_b = prepare_weights(wq, wk, wv, wp, bp, gamma)

    out = multi_head_attention(x, wqkv, wp_b, bp_b, gamma_b,
                               num_heads=num_heads, head_size=head_size)
    jax.block_until_ready(out)

    ref = reference(x, wq, wk, wv, wp, bp, gamma)
    # bf16 MXU inputs (f32 accumulation) + approx reciprocal vs. a pure-f32
    # reference -> compare with a bf16-appropriate tolerance.
    assert jnp.allclose(out, ref, atol=5e-3, rtol=5e-3), "mismatch vs reference"

    print("KERNEL_OK")
</pallas_src>

<mosaic_0001>
module attributes {stable_mosaic.version = 11 : i64} {
  func.func @mha_kernel(%arg0: i32, %arg1: memref<1x8x32xf32, #tpu.memory_space<vmem>>, %arg2: memref<32x96xbf16, #tpu.memory_space<vmem>>, %arg3: memref<32x32xbf16, #tpu.memory_space<vmem>>, %arg4: memref<1x32xf32, #tpu.memory_space<vmem>>, %arg5: memref<1x32xf32, #tpu.memory_space<vmem>>, %arg6: memref<1x8x32xf32, #tpu.memory_space<vmem>>) attributes {dimension_semantics = [#tpu.dimension_semantics<parallel>], iteration_bounds = array<i64: 2>, scalar_prefetch = 0 : i64, scratch_operands = 0 : i64, tpu.core_type = #tpu.core_type<tc>, window_params = [{transform_indices = @transform_0, window_bounds = array<i64: 1, 8, 32>}, {pipeline_mode = #tpu.pipeline_mode<synchronous>, transform_indices = @transform_1, window_bounds = array<i64: 32, 96>}, {pipeline_mode = #tpu.pipeline_mode<synchronous>, transform_indices = @transform_2, window_bounds = array<i64: 32, 32>}, {pipeline_mode = #tpu.pipeline_mode<synchronous>, transform_indices = @transform_3, window_bounds = array<i64: 1, 32>}, {pipeline_mode = #tpu.pipeline_mode<synchronous>, transform_indices = @transform_4, window_bounds = array<i64: 1, 32>}, {transform_indices = @transform_5, window_bounds = array<i64: 1, 8, 32>}]} {
    %c0 = arith.constant 0 : index
    %c0_0 = arith.constant 0 : index
    %c0_1 = arith.constant 0 : index
    %0 = vector.load %arg1[%c0, %c0_0, %c0_1] : memref<1x8x32xf32, #tpu.memory_space<vmem>>, vector<1x8x32xf32>
    %1 = vector.shape_cast %0 : vector<1x8x32xf32> to vector<8x32xf32>
    %2 = arith.truncf %1 : vector<8x32xf32> to vector<8x32xbf16>
    %c0_2 = arith.constant 0 : index
    %c0_3 = arith.constant 0 : index
    %3 = vector.load %arg2[%c0_2, %c0_3] : memref<32x96xbf16, #tpu.memory_space<vmem>>, vector<32x96xbf16>
    %cst = arith.constant dense<0.000000e+00> : vector<8x96xf32>
    %4 = tpu.matmul %2, %3, %cst {dimension_numbers = #tpu.dot_dimension_numbers<[1], [0], [0], [1], [0, 0, 1, 1], [], []>} : vector<8x32xbf16>, vector<32x96xbf16>, vector<8x96xf32> -> vector<8x96xf32>
    %5 = arith.truncf %4 : vector<8x96xf32> to vector<8x96xbf16>
    %6 = vector.extract_strided_slice %5 {offsets = [0, 0], sizes = [8, 32], strides = [1, 1]} : vector<8x96xbf16> to vector<8x32xbf16>
    %7 = vector.shape_cast %6 : vector<8x32xbf16> to vector<8x4x8xbf16>
    %8 = tpu.transpose %7, [1, 0, 2] : vector<8x4x8xbf16> -> vector<4x8x8xbf16>
    %9 = vector.extract_strided_slice %5 {offsets = [0, 32], sizes = [8, 32], strides = [1, 1]} : vector<8x96xbf16> to vector<8x32xbf16>
    %10 = vector.shape_cast %9 : vector<8x32xbf16> to vector<8x4x8xbf16>
    %11 = tpu.transpose %10, [1, 0, 2] : vector<8x4x8xbf16> -> vector<4x8x8xbf16>
    %12 = vector.extract_strided_slice %5 {offsets = [0, 64], sizes = [8, 32], strides = [1, 1]} : vector<8x96xbf16> to vector<8x32xbf16>
    %13 = vector.shape_cast %12 : vector<8x32xbf16> to vector<8x4x8xbf16>
    %14 = tpu.transpose %13, [1, 0, 2] : vector<8x4x8xbf16> -> vector<4x8x8xbf16>
    %15 = tpu.iota {dimensions = array<i32: 0>} : vector<8x8xi32>
    %16 = tpu.iota {dimensions = array<i32: 1>} : vector<8x8xi32>
    %17 = arith.cmpi sle, %16, %15 : vector<8x8xi32>
    %cst_4 = arith.constant 0.000000e+00 : f32
    %cst_5 = arith.constant -1.000000e+30 : f32
    %18 = vector.broadcast %cst_4 : f32 to vector<8x8xf32>
    %19 = vector.broadcast %cst_5 : f32 to vector<8x8xf32>
    %20 = arith.select %17, %18, %19 : vector<8x8xi1>, vector<8x8xf32>
    %21 = vector.shape_cast %20 : vector<8x8xf32> to vector<1x8x8xf32>
    "tpu.trace_start"() <{level = 10 : i32, message = "hqd,hkd->hqk"}> : () -> ()
    %cst_6 = arith.constant dense<0.000000e+00> : vector<4x8x8xf32>
    %22 = tpu.matmul %8, %11, %cst_6 {dimension_numbers = #tpu.dot_dimension_numbers<[2], [2], [1], [1], [0, 0, 0, 1, 1, 1], [0], [0]>} : vector<4x8x8xbf16>, vector<4x8x8xbf16>, vector<4x8x8xf32> -> vector<4x8x8xf32>
    "tpu.trace_stop"() : () -> ()
    %23 = vector.broadcast %21 : vector<1x8x8xf32> to vector<4x8x8xf32>
    %24 = arith.addf %22, %23 : vector<4x8x8xf32>
    %cst_7 = arith.constant dense<0xFF800000> : vector<4x8xf32>
    %25 = vector.multi_reduction <maximumf>, %24, %cst_7 [2] : vector<4x8x8xf32> to vector<4x8xf32>
    %26 = vector.shape_cast %25 : vector<4x8xf32> to vector<4x8x1xf32>
    %27 = vector.broadcast %26 : vector<4x8x1xf32> to vector<4x8x8xf32>
    %28 = arith.subf %24, %27 : vector<4x8x8xf32>
    %29 = math.exp %28 : vector<4x8x8xf32>
    %cst_8 = arith.constant dense<0.000000e+00> : vector<4x8xf32>
    %30 = vector.multi_reduction <add>, %29, %cst_8 [2] : vector<4x8x8xf32> to vector<4x8xf32>
    %31 = vector.shape_cast %30 : vector<4x8xf32> to vector<4x8x1xf32>
    %32 = arith.truncf %29 : vector<4x8x8xf32> to vector<4x8x8xbf16>
    "tpu.trace_start"() <{level = 10 : i32, message = "hqk,hkd->hqd"}> : () -> ()
    %cst_9 = arith.constant dense<0.000000e+00> : vector<4x8x8xf32>
    %33 = tpu.matmul %32, %14, %cst_9 {dimension_numbers = #tpu.dot_dimension_numbers<[2], [1], [1], [2], [0, 0, 0, 1, 1, 2], [0], [0]>} : vector<4x8x8xbf16>, vector<4x8x8xbf16>, vector<4x8x8xf32> -> vector<4x8x8xf32>
    "tpu.trace_stop"() : () -> ()
    %34 = tpu.reciprocal %31 {approx = true} : vector<4x8x1xf32> -> vector<4x8x1xf32>
    %35 = vector.broadcast %34 : vector<4x8x1xf32> to vector<4x8x8xf32>
    %36 = arith.mulf %33, %35 : vector<4x8x8xf32>
    %37 = tpu.transpose %36, [1, 0, 2] : vector<4x8x8xf32> -> vector<8x4x8xf32>
    %38 = vector.shape_cast %37 : vector<8x4x8xf32> to vector<8x32xf32>
    %39 = arith.truncf %38 : vector<8x32xf32> to vector<8x32xbf16>
    %c0_10 = arith.constant 0 : index
    %c0_11 = arith.constant 0 : index
    %40 = vector.load %arg3[%c0_10, %c0_11] : memref<32x32xbf16, #tpu.memory_space<vmem>>, vector<32x32xbf16>
    %cst_12 = arith.constant dense<0.000000e+00> : vector<8x32xf32>
    %41 = tpu.matmul %39, %40, %cst_12 {dimension_numbers = #tpu.dot_dimension_numbers<[1], [0], [0], [1], [0, 0, 1, 1], [], []>} : vector<8x32xbf16>, vector<32x32xbf16>, vector<8x32xf32> -> vector<8x32xf32>
    %c0_13 = arith.constant 0 : index
    %c0_14 = arith.constant 0 : index
    %42 = vector.load %arg4[%c0_13, %c0_14] : memref<1x32xf32, #tpu.memory_space<vmem>>, vector<1x32xf32>
    %43 = vector.broadcast %42 : vector<1x32xf32> to vector<8x32xf32>
    %44 = arith.addf %41, %43 : vector<8x32xf32>
    %cst_15 = arith.constant dense<0.000000e+00> : vector<8xf32>
    %45 = vector.multi_reduction <add>, %44, %cst_15 [1] : vector<8x32xf32> to vector<8xf32>
    %46 = vector.shape_cast %45 : vector<8xf32> to vector<8x1xf32>
    %cst_16 = arith.constant 3.200000e+01 : f32
    %47 = vector.broadcast %cst_16 : f32 to vector<8x1xf32>
    %48 = arith.divf %46, %47 : vector<8x1xf32>
    %49 = vector.broadcast %48 : vector<8x1xf32> to vector<8x32xf32>
    %50 = arith.subf %44, %49 : vector<8x32xf32>
    %51 = arith.mulf %50, %50 : vector<8x32xf32>
    %cst_17 = arith.constant dense<0.000000e+00> : vector<8xf32>
    %52 = vector.multi_reduction <add>, %51, %cst_17 [1] : vector<8x32xf32> to vector<8xf32>
    %53 = vector.shape_cast %52 : vector<8xf32> to vector<8x1xf32>
    %cst_18 = arith.constant 3.200000e+01 : f32
    %54 = vector.broadcast %cst_18 : f32 to vector<8x1xf32>
    %55 = arith.divf %53, %54 : vector<8x1xf32>
    %56 = vector.broadcast %48 : vector<8x1xf32> to vector<8x32xf32>
    %57 = arith.subf %44, %56 : vector<8x32xf32>
    %cst_19 = arith.constant 9.99999974E-6 : f32
    %58 = vector.broadcast %cst_19 : f32 to vector<8x1xf32>
    %59 = arith.addf %55, %58 : vector<8x1xf32>
    %60 = math.rsqrt %59 : vector<8x1xf32>
    %61 = vector.broadcast %60 : vector<8x1xf32> to vector<8x32xf32>
    %62 = arith.mulf %57, %61 : vector<8x32xf32>
    %c0_20 = arith.constant 0 : index
    %c0_21 = arith.constant 0 : index
    %63 = vector.load %arg5[%c0_20, %c0_21] : memref<1x32xf32, #tpu.memory_space<vmem>>, vector<1x32xf32>
    %64 = vector.broadcast %63 : vector<1x32xf32> to vector<8x32xf32>
    %65 = arith.mulf %62, %64 : vector<8x32xf32>
    %66 = vector.shape_cast %65 : vector<8x32xf32> to vector<1x8x32xf32>
    %c0_22 = arith.constant 0 : index
    %c0_23 = arith.constant 0 : index
    %c0_24 = arith.constant 0 : index
    %67 = vector.load %arg6[%c0_22, %c0_23, %c0_24] : memref<1x8x32xf32, #tpu.memory_space<vmem>>, vector<1x8x32xf32>
    tpu.vector_store %arg6[%c0_22, %c0_23, %c0_24], %66 {strides = array<i32>} : memref<1x8x32xf32, #tpu.memory_space<vmem>>, vector<1x8x32xf32>,
    return
  }
  func.func @transform_0(%arg0: i32) -> (i32, i32, i32) {
    %c0_i32 = arith.constant 0 : i32
    %c0_i32_0 = arith.constant 0 : i32
    %c0_i32_1 = arith.constant 0 : i32
    return %arg0, %c0_i32, %c0_i32_0 : i32, i32, i32
  }
  func.func @transform_1(%arg0: i32) -> (i32, i32) {
    %c0_i32 = arith.constant 0 : i32
    %c0_i32_0 = arith.constant 0 : i32
    %c0_i32_1 = arith.constant 0 : i32
    return %c0_i32, %c0_i32_0 : i32, i32
  }
  func.func @transform_2(%arg0: i32) -> (i32, i32) {
    %c0_i32 = arith.constant 0 : i32
    %c0_i32_0 = arith.constant 0 : i32
    %c0_i32_1 = arith.constant 0 : i32
    return %c0_i32, %c0_i32_0 : i32, i32
  }
  func.func @transform_3(%arg0: i32) -> (i32, i32) {
    %c0_i32 = arith.constant 0 : i32
    %c0_i32_0 = arith.constant 0 : i32
    %c0_i32_1 = arith.constant 0 : i32
    return %c0_i32, %c0_i32_0 : i32, i32
  }
  func.func @transform_4(%arg0: i32) -> (i32, i32) {
    %c0_i32 = arith.constant 0 : i32
    %c0_i32_0 = arith.constant 0 : i32
    %c0_i32_1 = arith.constant 0 : i32
    return %c0_i32, %c0_i32_0 : i32, i32
  }
  func.func @transform_5(%arg0: i32) -> (i32, i32, i32) {
    %c0_i32 = arith.constant 0 : i32
    %c0_i32_0 = arith.constant 0 : i32
    %c0_i32_1 = arith.constant 0 : i32
    return %arg0, %c0_i32, %c0_i32_0 : i32, i32, i32
  }
}

</mosaic_0001>

<llo_original>
// kernel: multi_head_attention.1
$region0: #{multi_head_attention.1}
  #allocation0 [shape = 'u32[]', space=smem, size = 0x4, offset = 0x4, fixed_abs, tag = 'smem constant byte address 0x4 - core index']
  #allocation1 [shape = 'u32[72,128]{1,0:T(1,128)}', space=vmem, size = 0x9000, scoped, tag = 'internal scratch']
  %s0 = inlined_call_operand.hbm [shape: f32[2,8,32], index: 0, kind: input, shape index: {}]
  %s1 = inlined_call_operand.hbm [shape: bf16[32,96], index: 1, kind: input, shape index: {}]
  %s2 = inlined_call_operand.hbm [shape: bf16[32,32], index: 2, kind: input, shape index: {}]
  %s3 = inlined_call_operand.vmem [shape: f32[1,32], index: 3, kind: input, shape index: {}]
  %s4 = inlined_call_operand.vmem [shape: f32[1,32], index: 4, kind: input, shape index: {}]
  %s5 = inlined_call_operand.hbm [shape: f32[2,8,32], index: 5, kind: output, shape index: {}]
  %s6 = sld [smem:[#allocation0]]
  $region65: #{multi_head_attention.1} parent=0
    _
  %s8 = ssub.s32 1, %s6
  %s9 = scalar_select 0, %s8, %s6
  $region1: #{multi_head_attention.1} parent=0
    #allocation2 [shape = 'u8[8192]{0}', space=vmem, size = 0x2000, scoped, tag = 'input window, operand 0']
    #allocation3 [shape = 's32[2]{0}', space=sflag, size = 0x8, scoped, tag = 'scoped memory for multi_head_attention.1']
    #allocation4 [shape = 's32[2]{0}', space=sflag, size = 0x8, scoped, tag = 'scoped memory for multi_head_attention.1']
    #allocation5 [shape = 'u8[8192]{0}', space=vmem, size = 0x2000, scoped, tag = 'input window, operand 1, single buffered']
    #allocation6 [shape = 's32[1]{0}', space=sflag, size = 0x4, scoped, tag = 'scoped memory for multi_head_attention.1']
    #allocation7 [shape = 'u8[8192]{0}', space=vmem, size = 0x2000, scoped, tag = 'input window, operand 2, single buffered']
    #allocation8 [shape = 'u8[8192]{0}', space=vmem, size = 0x2000, scoped, tag = 'output window, operand 0']
    %10 = vsyncpa [#allocation3], 0
    %s11 = scalar_lea.sflag [#allocation3], 1
    %12 = vsyncpa %s11, 0
    %13 = vsyncpa [#allocation6], 0
    %14 = vsyncpa [#allocation4], 0
    %s15 = scalar_lea.sflag [#allocation4], 1
    %16 = vsyncpa %s15, 0
    loop: start=0, step=1, limit=4
    $region2: #{multi_head_attention.1} parent=1 // loop_pre_header
      _
    $region3: #{multi_head_attention.1} parent=1 // loop_header
      %s18 = sphi 0, %s22
      %p19 = scmp.ge.s32.totalorder %s18, 4
      %s28 = sphi 0, %s30
      %s31 = sphi 0, %s28
      %s32 = sphi 0, %s31
      %s48 = sphi 0, %s32
      %s52 = sphi 0, %s52
      %s54 = sphi 0, %s52
      %s55 = sphi 0, %s54
      %s69 = sphi 0, %s55
      %s73 = sphi 0, %s73
      %s75 = sphi 0, %s73
      %s76 = sphi 0, %s75
      %s90 = sphi 0, %s76
      %s94 = sphi 0, %s94
      %s96 = sphi 0, %s94
      %s97 = sphi 0, %s96
      %s111 = sphi 0, %s97
      %s115 = sphi 0, %s115
      %s117 = sphi 0, %s115
      %s118 = sphi 0, %s117
      %s132 = sphi 0, %s118
      %s138 = sphi 0, %s140
      %s141 = sphi 0, %s138
      %s142 = sphi 0, %s141
      %s158 = sphi 0, %s142
    $region4: #{multi_head_attention.1} parent=1 // loop_header_branch
      %21 = sbr.rel (%p19) target = $region8
    $region5: #{multi_head_attention.1} parent=1 // loop_body
      %s23 = ssub.s32 %s18, 1
      %s24 = ssub.s32 %s18, 2
      %s25 = sadd.s32 %s18, 1
      %s26 = ssub.s32 %s18, %s25
      %p27 = scmp.eq.s32.totalorder %s26, 0
      %s29 = sadd.s32 %s28, 1
      %s30 = scalar_select %p27, %s28, %s29
      %p33 = pneg %p27
      %p34 = scmp.eq.s32.totalorder %s18, 1
      %p35 = por %p33, %p34
      %p36 = scmp.ne.s32.totalorder %s28, %s31
      %p37 = scmp.eq.s32.totalorder %s18, 0
      %p38 = por %p36, %p37
      %p39 = scmp.ne.s32.totalorder %s28, %s31
      %p40 = scmp.eq.s32.totalorder %s23, 1
      %p41 = por %p39, %p40
      %p42 = scmp.ne.s32.totalorder %s31, %s32
      %p43 = scmp.eq.s32.totalorder %s23, 0
      %p44 = por %p42, %p43
      %p45 = scmp.ne.s32.totalorder %s31, %s32
      %p46 = scmp.eq.s32.totalorder %s24, 1
      %p47 = por %p45, %p46
      %p49 = scmp.ne.s32.totalorder %s32, %s48
      %p50 = scmp.eq.s32.totalorder %s24, 0
      %p51 = por %p49, %p50
      %s53 = sadd.s32 %s52, 1
      %p56 = scmp.eq.s32.totalorder %s18, 1
      %p57 = scmp.ne.s32.totalorder %s52, %s54
      %p58 = scmp.eq.s32.totalorder %s18, 0
      %p59 = por %p57, %p58
      %p60 = scmp.ne.s32.totalorder %s52, %s54
      %p61 = scmp.eq.s32.totalorder %s23, 1
      %p62 = por %p60, %p61
      %p63 = scmp.ne.s32.totalorder %s54, %s55
      %p64 = scmp.eq.s32.totalorder %s23, 0
      %p65 = por %p63, %p64
      %p66 = scmp.ne.s32.totalorder %s54, %s55
      %p67 = scmp.eq.s32.totalorder %s24, 1
      %p68 = por %p66, %p67
      %p70 = scmp.ne.s32.totalorder %s55, %s69
      %p71 = scmp.eq.s32.totalorder %s24, 0
      %p72 = por %p70, %p71
      %s74 = sadd.s32 %s73, 1
      %p77 = scmp.eq.s32.totalorder %s18, 1
      %p78 = scmp.ne.s32.totalorder %s73, %s75
      %p79 = scmp.eq.s32.totalorder %s18, 0
      %p80 = por %p78, %p79
      %p81 = scmp.ne.s32.totalorder %s73, %s75
      %p82 = scmp.eq.s32.totalorder %s23, 1
      %p83 = por %p81, %p82
      %p84 = scmp.ne.s32.totalorder %s75, %s76
      %p85 = scmp.eq.s32.totalorder %s23, 0
      %p86 = por %p84, %p85
      %p87 = scmp.ne.s32.totalorder %s75, %s76
      %p88 = scmp.eq.s32.totalorder %s24, 1
      %p89 = por %p87, %p88
      %p91 = scmp.ne.s32.totalorder %s76, %s90
      %p92 = scmp.eq.s32.totalorder %s24, 0
      %p93 = por %p91, %p92
      %s95 = sadd.s32 %s94, 1
      %p98 = scmp.eq.s32.totalorder %s18, 1
      %p99 = scmp.ne.s32.totalorder %s94, %s96
      %p100 = scmp.eq.s32.totalorder %s18, 0
      %p101 = por %p99, %p100
      %p102 = scmp.ne.s32.totalorder %s94, %s96
      %p103 = scmp.eq.s32.totalorder %s23, 1
      %p104 = por %p102, %p103
      %p105 = scmp.ne.s32.totalorder %s96, %s97
      %p106 = scmp.eq.s32.totalorder %s23, 0
      %p107 = por %p105, %p106
      %p108 = scmp.ne.s32.totalorder %s96, %s97
      %p109 = scmp.eq.s32.totalorder %s24, 1
      %p110 = por %p108, %p109
      %p112 = scmp.ne.s32.totalorder %s97, %s111
      %p113 = scmp.eq.s32.totalorder %s24, 0
      %p114 = por %p112, %p113
      %s116 = sadd.s32 %s115, 1
      %p119 = scmp.eq.s32.totalorder %s18, 1
      %p120 = scmp.ne.s32.totalorder %s115, %s117
      %p121 = scmp.eq.s32.totalorder %s18, 0
      %p122 = por %p120, %p121
      %p123 = scmp.ne.s32.totalorder %s115, %s117
      %p124 = scmp.eq.s32.totalorder %s23, 1
      %p125 = por %p123, %p124
      %p126 = scmp.ne.s32.totalorder %s117, %s118
      %p127 = scmp.eq.s32.totalorder %s23, 0
      %p128 = por %p126, %p127
      %p129 = scmp.ne.s32.totalorder %s117, %s118
      %p130 = scmp.eq.s32.totalorder %s24, 1
      %p131 = por %p129, %p130
      %p133 = scmp.ne.s32.totalorder %s118, %s132
      %p134 = scmp.eq.s32.totalorder %s24, 0
      %p135 = por %p133, %p134
      %s136 = ssub.s32 %s18, %s25
      %p137 = scmp.eq.s32.totalorder %s136, 0
      %s139 = sadd.s32 %s138, 1
      %s140 = scalar_select %p137, %s138, %s139
      %p143 = pneg %p137
      %p144 = scmp.eq.s32.totalorder %s18, 1
      %p145 = por %p143, %p144
      %p146 = scmp.ne.s32.totalorder %s138, %s141
      %p147 = scmp.eq.s32.totalorder %s18, 0
      %p148 = por %p146, %p147
      %p149 = scmp.ne.s32.totalorder %s138, %s141
      %p150 = scmp.eq.s32.totalorder %s23, 1
      %p151 = por %p149, %p150
      %p152 = scmp.ne.s32.totalorder %s141, %s142
      %p153 = scmp.eq.s32.totalorder %s23, 0
      %p154 = por %p152, %p153
      %p155 = scmp.ne.s32.totalorder %s141, %s142
      %p156 = scmp.eq.s32.totalorder %s24, 1
      %p157 = por %p155, %p156
      %p159 = scmp.ne.s32.totalorder %s142, %s158
      %p160 = scmp.eq.s32.totalorder %s24, 0
      %p161 = por %p159, %p160
      %p162 = scmp.le.s32.totalorder 1, %s18
      %p163 = scmp.lt.s32.totalorder %s18, 3
      %p164 = pnand %p162, %p163
      %p165 = pneg %p164
      // Predicated region
      $region9: #{multi_head_attention.1} parent=5 // pred_check
        _
      $region10: #{multi_head_attention.1} parent=5 // pred_check_branch
        %167 = sbr.rel (%p164) target = $region12
      $region11: #{multi_head_attention.1} parent=5 // pred_region
        %s168 = ssub.s32 %s18, 1
        // Predicated region
        $region13: #{multi_head_attention.1} parent=11 // pred_check
          %p169 = pneg %p65
        $region14: #{multi_head_attention.1} parent=11 // pred_check_branch
          %171 = sbr.rel (%p169) target = $region16
        $region15: #{multi_head_attention.1} parent=11 // pred_region
          %173 = vsyncadd [#allocation6], 0
          %s174 = sshll.u32 %s1, 4
          %s175 = int_to_ptr.hbm [resolvable:$true] %s174
          %s176 = sshll.u32 [#allocation5], 4
          %s177 = int_to_ptr.vmem [resolvable:$true] %s176
          %182 = dma.hbm_to_vmem [thread:$0]  %s175, 256, %s177, [#allocation6], 64, 64, 4
        $region16: #{multi_head_attention.1} parent=11 // pred_fallthru
          _
        // Predicated region
        $region17: #{multi_head_attention.1} parent=11 // pred_check
          %p183 = pneg %p86
        $region18: #{multi_head_attention.1} parent=11 // pred_check_branch
          %185 = sbr.rel (%p183) target = $region20
        $region19: #{multi_head_attention.1} parent=11 // pred_region
          %187 = vsyncadd [#allocation6], 0
          %s188 = sshll.u32 %s2, 4
          %s189 = int_to_ptr.hbm [resolvable:$true] %s188
          %s190 = sshll.u32 [#allocation7], 4
          %s191 = int_to_ptr.vmem [resolvable:$true] %s190
          %196 = dma.hbm_to_vmem [thread:$0]  %s189, 256, %s191, [#allocation6], 64, 64, 4
        $region20: #{multi_head_attention.1} parent=11 // pred_fallthru
          _
        // Predicated region
        $region21: #{multi_head_attention.1} parent=11 // pred_check
          %p197 = pneg %p107
        $region22: #{multi_head_attention.1} parent=11 // pred_check_branch
          %199 = sbr.rel (%p197) target = $region24
        $region23: #{multi_head_attention.1} parent=11 // pred_region
          _
        $region24: #{multi_head_attention.1} parent=11 // pred_fallthru
          _
        // Predicated region
        $region25: #{multi_head_attention.1} parent=11 // pred_check
          %p200 = pneg %p128
        $region26: #{multi_head_attention.1} parent=11 // pred_check_branch
          %202 = sbr.rel (%p200) target = $region28
        $region27: #{multi_head_attention.1} parent=11 // pred_region
          _
        $region28: #{multi_head_attention.1} parent=11 // pred_fallthru
          _
      $region12: #{multi_head_attention.1} parent=5 // pred_fallthru
        _
      %p203 = scmp.lt.s32.totalorder %s18, 2
      // Predicated region
      $region29: #{multi_head_attention.1} parent=5 // pred_check
        %p204 = pneg %p203
      $region30: #{multi_head_attention.1} parent=5 // pred_check_branch
        %206 = sbr.rel (%p204) target = $region32
      $region31: #{multi_head_attention.1} parent=5 // pred_region
        // Predicated region
        $region33: #{multi_head_attention.1} parent=31 // pred_check
          %p207 = pneg %p38
        $region34: #{multi_head_attention.1} parent=31 // pred_check_branch
          %209 = sbr.rel (%p207) target = $region36
        $region35: #{multi_head_attention.1} parent=31 // pred_region
          %s210 = sand.u32 %s28, 1
          %s211 = scalar_lea.sflag [#allocation3], %s210
          %s212 = sand.u32 %s28, 1
          %s213 = smul.addr %s212, 8
          %s214 = scalar_lea.vmem [#allocation2], %s213
          %216 = vsyncadd %s211, 0
          %s217 = smul.addr %s18, 8
          %s218 = scalar_lea.hbm %s0, %s217
          %s220 = sshll.u32 %s218, 4
          %s221 = int_to_ptr.hbm [resolvable:$true] %s220
          %s222 = sshll.u32 %s214, 4
          %s223 = int_to_ptr.vmem [resolvable:$true] %s222
          %225 = dma.hbm_to_vmem [thread:$0]  %s221, 128, %s223, %s211
        $region36: #{multi_head_attention.1} parent=31 // pred_fallthru
          _
      $region32: #{multi_head_attention.1} parent=5 // pred_fallthru
        _
      %p226 = scmp.le.s32.totalorder 1, %s18
      %p227 = scmp.lt.s32.totalorder %s18, 3
      %p228 = pnand %p226, %p227
      %p229 = pneg %p228
      // Predicated region
      $region37: #{multi_head_attention.1} parent=5 // pred_check
        _
      $region38: #{multi_head_attention.1} parent=5 // pred_check_branch
        %231 = sbr.rel (%p228) target = $region40
      $region39: #{multi_head_attention.1} parent=5 // pred_region
        %s232 = ssub.s32 %s18, 1
        %s233 = sand.u32 %s31, 1
        %s234 = scalar_lea.sflag [#allocation3], %s233
        %s235 = sand.u32 %s31, 1
        %s236 = smul.addr %s235, 8
        %s237 = scalar_lea.vmem [#allocation2], %s236
        // Predicated region
        $region41: #{multi_head_attention.1} parent=39 // pred_check
          %p238 = pneg %p44
        $region42: #{multi_head_attention.1} parent=39 // pred_check_branch
          %240 = sbr.rel (%p238) target = $region44
        $region43: #{multi_head_attention.1} parent=39 // pred_region
          %242 = dma.done %s234, 128
        $region44: #{multi_head_attention.1} parent=39 // pred_fallthru
          _
        // Predicated region
        $region45: #{multi_head_attention.1} parent=39 // pred_check
          %p243 = pneg %p65
        $region46: #{multi_head_attention.1} parent=39 // pred_check_branch
          %245 = sbr.rel (%p243) target = $region48
        $region47: #{multi_head_attention.1} parent=39 // pred_region
          %247 = dma.done [#allocation6], 256
        $region48: #{multi_head_attention.1} parent=39 // pred_fallthru
          _
        // Predicated region
        $region49: #{multi_head_attention.1} parent=39 // pred_check
          %p248 = pneg %p86
        $region50: #{multi_head_attention.1} parent=39 // pred_check_branch
          %250 = sbr.rel (%p248) target = $region52
        $region51: #{multi_head_attention.1} parent=39 // pred_region
          %252 = dma.done [#allocation6], 256
        $region52: #{multi_head_attention.1} parent=39 // pred_fallthru
          _
        %s253 = sand.u32 %s31, 1
        %s254 = scalar_lea.sflag [#allocation3], %s253
        %s255 = sand.u32 %s31, 1
        %s256 = smul.addr %s255, 8
        %s257 = scalar_lea.vmem [#allocation2], %s256
        %p258 = pneg %p44
        %p259 = pneg %p41
        %p260 = pneg %p65
        %p261 = pneg %p62
        %p262 = pneg %p86
        %p263 = pneg %p83
        %p264 = pneg %p107
        %p265 = pneg %p104
        %p266 = pneg %p128
        %p267 = pneg %p125
        %p268 = pneg %p154
        %p269 = pneg %p151
        %s270 = sand.u32 %s141, 1
        %s271 = scalar_lea.sflag [#allocation4], %s270
        %s272 = sand.u32 %s141, 1
        %s273 = smul.addr %s272, 8
        %s274 = scalar_lea.vmem [#allocation8], %s273
        %v276 = vld [vmem:[%s237] sm:$0xff]
        %v277 = vpack.c.bf16 %v276, %v276
        %v278 = vld [vmem:[#allocation5] sm:$0xf]
        %v279 = vld [vmem:[#allocation5 + $0x4] sm:$0xf]
        %v280 = vld [vmem:[#allocation5 + $0x8] sm:$0xf]
        %v281 = vld [vmem:[#allocation5 + $0xc] sm:$0xf]
        %v286 = vunpack.c.l.b16 %v278
        %v287 = vunpack.c.l.b16 %v279
        %v288 = vunpack.c.l.b16 %v280
        %v289 = vunpack.c.l.b16 %v281
        %v290 = vpack.c.b16 %v287, %v286
        %v291 = vpack.c.b16 %v289, %v288
        %vm294 = vcmask 261120
        %v296 = vsel %vm294, %v277, 0
        %298 = vmatpush.bf16.msra.mxu0 0
        %299 = vmatpush.bf16.msra.mxu0 0
        %300 = vmatpush.bf16.msra.mxu0 0
        %301 = vmatpush.bf16.msra.mxu0 0
        %302 = vmatpush.bf16.msra.mxu0 0
        %303 = vmatpush.bf16.msra.mxu0 0
        %304 = vmatpush.bf16.msra.mxu0 %v291
        %305 = vmatpush.bf16.msra.mxu0 %v290
        %306 = vmatmul.bf16.gmra.mxu0 %v296
        %v307 = vpop.f32.mrf.mxu0
        %v308 = vadd.f32 0.0, %v307
        %v309 = vpop.f32.mrf.mxu0
        %310 = vdwg.mxu0
        %v311 = vpack.c.bf16 %v308, %v308
        %313 = vrot.lane.b32.xlu0 %v311, 120
        %v314 = vpop.permute.xlu0 %313
        %315 = vrot.lane.b32.xlu0 %v311, 112
        %v316 = vpop.permute.xlu0 %315
        %317 = vrot.lane.b32.xlu0 %v311, 104
        %v318 = vpop.permute.xlu0 %317
        %v321 = vpack.i.b16 %v314, %v311
        %v322 = vshrl.u32 %v311, 16
        %v323 = vshrl.u32 %v314, 16
        %v324 = vpack.i.b16 %v323, %v322
        %v327 = vpack.i.b16 %v318, %v316
        %v328 = vshrl.u32 %v316, 16
        %v329 = vshrl.u32 %v318, 16
        %v330 = vpack.i.b16 %v329, %v328
        %v333 = vunpack.c.l.s4 1983009808
        %v334 = vunpack.c.0.s8 %v333
        %v335 = vperm.slane %v321, %v334
        %v338 = vunpack.c.l.s4 1983009808
        %v339 = vunpack.c.0.s8 %v338
        %v340 = vperm.slane %v327, %v339
        %v341 = vrot.slane %v340, 4
        %vm342 = vcmask 1047556
        %v343 = vsel %vm342, %v341, %v335
        %v344 = vrot.slane %v335, 4
        %v345 = vsel %vm342, %v340, %v344
        %v347 = vunpack.c.l.s4 1934713408
        %v348 = vunpack.c.0.s8 %v347
        %v349 = vperm.slane %v343, %v348
        %v351 = vunpack.c.l.s4 1934713408
        %v352 = vunpack.c.0.s8 %v351
        %v353 = vperm.slane %v345, %v352
        %v354 = vrot.slane %v349, 4
        %v355 = vsel %vm342, 0, %v354
        %v356 = vrot.slane %v353, 4
        %v357 = vsel %vm342, 0, %v356
        %v360 = vunpack.c.l.s4 1983009808
        %v361 = vunpack.c.0.s8 %v360
        %v362 = vperm.slane %v324, %v361
        %v365 = vunpack.c.l.s4 1983009808
        %v366 = vunpack.c.0.s8 %v365
        %v367 = vperm.slane %v330, %v366
        %v368 = vrot.slane %v367, 4
        %v369 = vsel %vm342, %v368, %v362
        %v370 = vrot.slane %v362, 4
        %v371 = vsel %vm342, %v367, %v370
        %v373 = vunpack.c.l.s4 1934713408
        %v374 = vunpack.c.0.s8 %v373
        %v375 = vperm.slane %v369, %v374
        %v377 = vunpack.c.l.s4 1934713408
        %v378 = vunpack.c.0.s8 %v377
        %v379 = vperm.slane %v371, %v378
        %v380 = vrot.slane %v375, 4
        %v381 = vsel %vm342, 0, %v380
        %v382 = vrot.slane %v379, 4
        %v383 = vsel %vm342, 0, %v382
        %v384 = vsel %vm342, %v356, %v349
        %v386 = vunpack.c.l.s4 1983009808
        %v387 = vunpack.c.0.s8 %v386
        %v388 = vperm.slane %v384, %v387
        %v389 = vrot.slane %v357, 4
        %v390 = vsel %vm342, %v389, %v355
        %v392 = vunpack.c.l.s4 1983009808
        %v393 = vunpack.c.0.s8 %v392
        %v394 = vperm.slane %v390, %v393
        %v395 = vrot.slane %v394, 4
        %v396 = vsel %vm342, %v395, %v388
        %v398 = vunpack.c.l.s4 1934713408
        %v399 = vunpack.c.0.s8 %v398
        %v400 = vperm.slane %v396, %v399
        %v401 = vrot.slane %v400, 4
        %v402 = vsel %vm342, 0, %v401
        %v403 = vsel %vm342, %v382, %v375
        %v405 = vunpack.c.l.s4 1983009808
        %v406 = vunpack.c.0.s8 %v405
        %v407 = vperm.slane %v403, %v406
        %v408 = vrot.slane %v383, 4
        %v409 = vsel %vm342, %v408, %v381
        %v411 = vunpack.c.l.s4 1983009808
        %v412 = vunpack.c.0.s8 %v411
        %v413 = vperm.slane %v409, %v412
        %v414 = vrot.slane %v413, 4
        %v415 = vsel %vm342, %v414, %v407
        %v417 = vunpack.c.l.s4 1934713408
        %v418 = vunpack.c.0.s8 %v417
        %v419 = vperm.slane %v415, %v418
        %v420 = vrot.slane %v419, 4
        %v421 = vsel %vm342, 0, %v420
        %v424 = vpack.i.b16 %v419, %v400
        %v425 = vshrl.u32 %v400, 16
        %v426 = vshrl.u32 %v419, 16
        %v427 = vpack.i.b16 %v426, %v425
        %v430 = vpack.i.b16 %v421, %v402
        %v431 = vshrl.u32 %v402, 16
        %v432 = vshrl.u32 %v421, 16
        %v433 = vpack.i.b16 %v432, %v431
        %434 = vrot.lane.b32.xlu0 %v311, 96
        %v435 = vpop.permute.xlu0 %434
        %436 = vrot.lane.b32.xlu0 %v314, 96
        %v437 = vpop.permute.xlu0 %436
        %438 = vrot.lane.b32.xlu0 %v316, 96
        %v439 = vpop.permute.xlu0 %438
        %440 = vrot.lane.b32.xlu0 %v318, 96
        %v441 = vpop.permute.xlu0 %440
        %v444 = vpack.i.b16 %v437, %v435
        %v445 = vshrl.u32 %v435, 16
        %v446 = vshrl.u32 %v437, 16
        %v447 = vpack.i.b16 %v446, %v445
        %v450 = vpack.i.b16 %v441, %v439
        %v451 = vshrl.u32 %v439, 16
        %v452 = vshrl.u32 %v441, 16
        %v453 = vpack.i.b16 %v452, %v451
        %v456 = vunpack.c.l.s4 1983009808
        %v457 = vunpack.c.0.s8 %v456
        %v458 = vperm.slane %v444, %v457
        %v461 = vunpack.c.l.s4 1983009808
        %v462 = vunpack.c.0.s8 %v461
        %v463 = vperm.slane %v450, %v462
        %v464 = vrot.slane %v463, 4
        %v465 = vsel %vm342, %v464, %v458
        %v466 = vrot.slane %v458, 4
        %v467 = vsel %vm342, %v463, %v466
        %v469 = vunpack.c.l.s4 1934713408
        %v470 = vunpack.c.0.s8 %v469
        %v471 = vperm.slane %v465, %v470
        %v473 = vunpack.c.l.s4 1934713408
        %v474 = vunpack.c.0.s8 %v473
        %v475 = vperm.slane %v467, %v474
        %v476 = vrot.slane %v471, 4
        %v477 = vsel %vm342, 0, %v476
        %v478 = vrot.slane %v475, 4
        %v479 = vsel %vm342, 0, %v478
        %v482 = vunpack.c.l.s4 1983009808
        %v483 = vunpack.c.0.s8 %v482
        %v484 = vperm.slane %v447, %v483
        %v487 = vunpack.c.l.s4 1983009808
        %v488 = vunpack.c.0.s8 %v487
        %v489 = vperm.slane %v453, %v488
        %v490 = vrot.slane %v489, 4
        %v491 = vsel %vm342, %v490, %v484
        %v492 = vrot.slane %v484, 4
        %v493 = vsel %vm342, %v489, %v492
        %v495 = vunpack.c.l.s4 1934713408
        %v496 = vunpack.c.0.s8 %v495
        %v497 = vperm.slane %v491, %v496
        %v499 = vunpack.c.l.s4 1934713408
        %v500 = vunpack.c.0.s8 %v499
        %v501 = vperm.slane %v493, %v500
        %v502 = vrot.slane %v497, 4
        %v503 = vsel %vm342, 0, %v502
        %v504 = vrot.slane %v501, 4
        %v505 = vsel %vm342, 0, %v504
        %v506 = vsel %vm342, %v478, %v471
        %v508 = vunpack.c.l.s4 1983009808
        %v509 = vunpack.c.0.s8 %v508
        %v510 = vperm.slane %v506, %v509
        %v511 = vrot.slane %v479, 4
        %v512 = vsel %vm342, %v511, %v477
        %v514 = vunpack.c.l.s4 1983009808
        %v515 = vunpack.c.0.s8 %v514
        %v516 = vperm.slane %v512, %v515
        %v517 = vrot.slane %v516, 4
        %v518 = vsel %vm342, %v517, %v510
        %v520 = vunpack.c.l.s4 1934713408
        %v521 = vunpack.c.0.s8 %v520
        %v522 = vperm.slane %v518, %v521
        %v523 = vrot.slane %v522, 4
        %v524 = vsel %vm342, 0, %v523
        %v525 = vsel %vm342, %v504, %v497
        %v527 = vunpack.c.l.s4 1983009808
        %v528 = vunpack.c.0.s8 %v527
        %v529 = vperm.slane %v525, %v528
        %v530 = vrot.slane %v505, 4
        %v531 = vsel %vm342, %v530, %v503
        %v533 = vunpack.c.l.s4 1983009808
        %v534 = vunpack.c.0.s8 %v533
        %v535 = vperm.slane %v531, %v534
        %v536 = vrot.slane %v535, 4
        %v537 = vsel %vm342, %v536, %v529
        %v539 = vunpack.c.l.s4 1934713408
        %v540 = vunpack.c.0.s8 %v539
        %v541 = vperm.slane %v537, %v540
        %v542 = vrot.slane %v541, 4
        %v543 = vsel %vm342, 0, %v542
        %v546 = vpack.i.b16 %v541, %v522
        %v547 = vshrl.u32 %v522, 16
        %v548 = vshrl.u32 %v541, 16
        %v549 = vpack.i.b16 %v548, %v547
        %v552 = vpack.i.b16 %v543, %v524
        %v553 = vshrl.u32 %v524, 16
        %v554 = vshrl.u32 %v543, 16
        %v555 = vpack.i.b16 %v554, %v553
        %556 = vrot.lane.b32.xlu0 %v311, 64
        %v557 = vpop.permute.xlu0 %556
        %558 = vrot.lane.b32.xlu0 %v314, 64
        %v559 = vpop.permute.xlu0 %558
        %560 = vrot.lane.b32.xlu0 %v316, 64
        %v561 = vpop.permute.xlu0 %560
        %562 = vrot.lane.b32.xlu0 %v318, 64
        %v563 = vpop.permute.xlu0 %562
        %v566 = vpack.i.b16 %v559, %v557
        %v567 = vshrl.u32 %v557, 16
        %v568 = vshrl.u32 %v559, 16
        %v569 = vpack.i.b16 %v568, %v567
        %v572 = vpack.i.b16 %v563, %v561
        %v573 = vshrl.u32 %v561, 16
        %v574 = vshrl.u32 %v563, 16
        %v575 = vpack.i.b16 %v574, %v573
        %v578 = vunpack.c.l.s4 1983009808
        %v579 = vunpack.c.0.s8 %v578
        %v580 = vperm.slane %v566, %v579
        %v583 = vunpack.c.l.s4 1983009808
        %v584 = vunpack.c.0.s8 %v583
        %v585 = vperm.slane %v572, %v584
        %v586 = vrot.slane %v585, 4
        %v587 = vsel %vm342, %v586, %v580
        %v588 = vrot.slane %v580, 4
        %v589 = vsel %vm342, %v585, %v588
        %v591 = vunpack.c.l.s4 1934713408
        %v592 = vunpack.c.0.s8 %v591
        %v593 = vperm.slane %v587, %v592
        %v595 = vunpack.c.l.s4 1934713408
        %v596 = vunpack.c.0.s8 %v595
        %v597 = vperm.slane %v589, %v596
        %v598 = vrot.slane %v593, 4
        %v599 = vsel %vm342, 0, %v598
        %v600 = vrot.slane %v597, 4
        %v601 = vsel %vm342, 0, %v600
        %v604 = vunpack.c.l.s4 1983009808
        %v605 = vunpack.c.0.s8 %v604
        %v606 = vperm.slane %v569, %v605
        %v609 = vunpack.c.l.s4 1983009808
        %v610 = vunpack.c.0.s8 %v609
        %v611 = vperm.slane %v575, %v610
        %v612 = vrot.slane %v611, 4
        %v613 = vsel %vm342, %v612, %v606
        %v614 = vrot.slane %v606, 4
        %v615 = vsel %vm342, %v611, %v614
        %v617 = vunpack.c.l.s4 1934713408
        %v618 = vunpack.c.0.s8 %v617
        %v619 = vperm.slane %v613, %v618
        %v621 = vunpack.c.l.s4 1934713408
        %v622 = vunpack.c.0.s8 %v621
        %v623 = vperm.slane %v615, %v622
        %v624 = vrot.slane %v619, 4
        %v625 = vsel %vm342, 0, %v624
        %v626 = vrot.slane %v623, 4
        %v627 = vsel %vm342, 0, %v626
        %v628 = vsel %vm342, %v600, %v593
        %v630 = vunpack.c.l.s4 1983009808
        %v631 = vunpack.c.0.s8 %v630
        %v632 = vperm.slane %v628, %v631
        %v633 = vrot.slane %v601, 4
        %v634 = vsel %vm342, %v633, %v599
        %v636 = vunpack.c.l.s4 1983009808
        %v637 = vunpack.c.0.s8 %v636
        %v638 = vperm.slane %v634, %v637
        %v639 = vrot.slane %v638, 4
        %v640 = vsel %vm342, %v639, %v632
        %v642 = vunpack.c.l.s4 1934713408
        %v643 = vunpack.c.0.s8 %v642
        %v644 = vperm.slane %v640, %v643
        %v645 = vrot.slane %v644, 4
        %v646 = vsel %vm342, 0, %v645
        %v647 = vsel %vm342, %v626, %v619
        %v649 = vunpack.c.l.s4 1983009808
        %v650 = vunpack.c.0.s8 %v649
        %v651 = vperm.slane %v647, %v650
        %v652 = vrot.slane %v627, 4
        %v653 = vsel %vm342, %v652, %v625
        %v655 = vunpack.c.l.s4 1983009808
        %v656 = vunpack.c.0.s8 %v655
        %v657 = vperm.slane %v653, %v656
        %v658 = vrot.slane %v657, 4
        %v659 = vsel %vm342, %v658, %v651
        %v661 = vunpack.c.l.s4 1934713408
        %v662 = vunpack.c.0.s8 %v661
        %v663 = vperm.slane %v659, %v662
        %v664 = vrot.slane %v663, 4
        %v665 = vsel %vm342, 0, %v664
        %v668 = vpack.i.b16 %v663, %v644
        %v669 = vshrl.u32 %v644, 16
        %v670 = vshrl.u32 %v663, 16
        %v671 = vpack.i.b16 %v670, %v669
        %v674 = vpack.i.b16 %v665, %v646
        %v675 = vshrl.u32 %v646, 16
        %v676 = vshrl.u32 %v665, 16
        %v677 = vpack.i.b16 %v676, %v675
        %v678 = vlaneseq
        %v679 = vshrl.u32 %v678, 7
        %v680 = vlaneseq
        %v681 = vand.u32 %v680, 127
        %vm682 = vcmp.le.s32.totalorder %v681, %v679
        %v683 = vsel %vm682, 0.0, -1e+30
        %vm684 = vcmask 64512
        %v686 = vsel %vm684, %v424, 0
        %v689 = vsel %vm684, %v546, 0
        %691 = vmatpush.bf16.xpose.msra.mxu0 0
        %692 = vmatpush.bf16.xpose.msra.mxu0 0
        %693 = vmatpush.bf16.xpose.msra.mxu0 0
        %694 = vmatpush.bf16.xpose.msra.mxu0 0
        %695 = vmatpush.bf16.xpose.msra.mxu0 0
        %696 = vmatpush.bf16.xpose.msra.mxu0 0
        %697 = vmatpush.bf16.xpose.msra.mxu0 0
        %698 = vmatpush.bf16.xpose.msra.mxu0 %v689
        %699 = vmatmul.bf16.gmra.mxu0 %v686
        %v700 = vpop.f32.mrf.mxu0
        %v701 = vadd.f32 %v683, %v700
        %v702 = vpop.f32.mrf.mxu0
        %703 = vdwg.mxu0
        %v705 = vsel %vm684, %v427, 0
        %v708 = vsel %vm684, %v549, 0
        %710 = vmatpush.bf16.xpose.msra.mxu0 0
        %711 = vmatpush.bf16.xpose.msra.mxu0 0
        %712 = vmatpush.bf16.xpose.msra.mxu0 0
        %713 = vmatpush.bf16.xpose.msra.mxu0 0
        %714 = vmatpush.bf16.xpose.msra.mxu0 0
        %715 = vmatpush.bf16.xpose.msra.mxu0 0
        %716 = vmatpush.bf16.xpose.msra.mxu0 0
        %717 = vmatpush.bf16.xpose.msra.mxu0 %v708
        %718 = vmatmul.bf16.gmra.mxu0 %v705
        %v719 = vpop.f32.mrf.mxu0
        %v720 = vadd.f32 %v683, %v719
        %v721 = vpop.f32.mrf.mxu0
        %722 = vdwg.mxu0
        %v724 = vsel %vm684, %v430, 0
        %v727 = vsel %vm684, %v552, 0
        %729 = vmatpush.bf16.xpose.msra.mxu0 0
        %730 = vmatpush.bf16.xpose.msra.mxu0 0
        %731 = vmatpush.bf16.xpose.msra.mxu0 0
        %732 = vmatpush.bf16.xpose.msra.mxu0 0
        %733 = vmatpush.bf16.xpose.msra.mxu0 0
        %734 = vmatpush.bf16.xpose.msra.mxu0 0
        %735 = vmatpush.bf16.xpose.msra.mxu0 0
        %736 = vmatpush.bf16.xpose.msra.mxu0 %v727
        %737 = vmatmul.bf16.gmra.mxu0 %v724
        %v738 = vpop.f32.mrf.mxu0
        %v739 = vadd.f32 %v683, %v738
        %v740 = vpop.f32.mrf.mxu0
        %741 = vdwg.mxu0
        %v743 = vsel %vm684, %v433, 0
        %v746 = vsel %vm684, %v555, 0
        %748 = vmatpush.bf16.xpose.msra.mxu0 0
        %749 = vmatpush.bf16.xpose.msra.mxu0 0
        %750 = vmatpush.bf16.xpose.msra.mxu0 0
        %751 = vmatpush.bf16.xpose.msra.mxu0 0
        %752 = vmatpush.bf16.xpose.msra.mxu0 0
        %753 = vmatpush.bf16.xpose.msra.mxu0 0
        %754 = vmatpush.bf16.xpose.msra.mxu0 0
        %755 = vmatpush.bf16.xpose.msra.mxu0 %v746
        %756 = vmatmul.bf16.gmra.mxu0 %v743
        %v757 = vpop.f32.mrf.mxu0
        %v758 = vadd.f32 %v683, %v757
        %v759 = vpop.f32.mrf.mxu0
        %760 = vdwg.mxu0
        %v761 = vsel %vm684, %v701, -inf
        %762 = vmax.xlane.f32.xlu0 %v761
        %v763 = vpop.xlane.xlu0 %762
        %v764 = vsel %vm684, %v720, -inf
        %765 = vmax.xlane.f32.xlu0 %v764
        %v766 = vpop.xlane.xlu0 %765
        %v767 = vsel %vm684, %v739, -inf
        %768 = vmax.xlane.f32.xlu0 %v767
        %v769 = vpop.xlane.xlu0 %768
        %v770 = vsel %vm684, %v758, -inf
        %771 = vmax.xlane.f32.xlu0 %v770
        %v772 = vpop.xlane.xlu0 %771
        %v773 = vsub.f32 %v701, %v763
        %v774 = vsub.f32 %v720, %v766
        %v775 = vsub.f32 %v739, %v769
        %v776 = vsub.f32 %v758, %v772
        %v777 = vmul.f32 %v773, 1.442695
        %v778 = vpow.pop %v777
        %v779 = vmul.f32 %v774, 1.442695
        %v780 = vpow.pop %v779
        %v781 = vmul.f32 %v775, 1.442695
        %v782 = vpow.pop %v781
        %v783 = vmul.f32 %v776, 1.442695
        %v784 = vpow.pop %v783
        %v785 = vsel %vm684, %v778, 0.0
        %786 = vadd.xlane.f32.xlu0 %v785
        %v787 = vpop.xlane.xlu0 %786
        %v788 = vsel %vm684, %v780, 0.0
        %789 = vadd.xlane.f32.xlu0 %v788
        %v790 = vpop.xlane.xlu0 %789
        %v791 = vsel %vm684, %v782, 0.0
        %792 = vadd.xlane.f32.xlu0 %v791
        %v793 = vpop.xlane.xlu0 %792
        %v794 = vsel %vm684, %v784, 0.0
        %795 = vadd.xlane.f32.xlu0 %v794
        %v796 = vpop.xlane.xlu0 %795
        %v797 = vpack.c.bf16 %v778, %v778
        %v798 = vpack.c.bf16 %v780, %v780
        %v799 = vpack.c.bf16 %v782, %v782
        %v800 = vpack.c.bf16 %v784, %v784
        %v802 = vsel %vm684, %v797, 0
        %vm804 = vcmask 1043456
        %v806 = vsel %vm804, %v668, 0
        %808 = vmatpush.bf16.msra.mxu0 0
        %809 = vmatpush.bf16.msra.mxu0 0
        %810 = vmatpush.bf16.msra.mxu0 0
        %811 = vmatpush.bf16.msra.mxu0 0
        %812 = vmatpush.bf16.msra.mxu0 0
        %813 = vmatpush.bf16.msra.mxu0 0
        %814 = vmatpush.bf16.msra.mxu0 0
        %815 = vmatpush.bf16.msra.mxu0 %v806
        %816 = vmatmul.bf16.gmra.mxu0 %v802
        %v817 = vpop.f32.mrf.mxu0
        %v818 = vadd.f32 0.0, %v817
        %v819 = vpop.f32.mrf.mxu0
        %820 = vdwg.mxu0
        %v822 = vsel %vm684, %v798, 0
        %v825 = vsel %vm804, %v671, 0
        %827 = vmatpush.bf16.msra.mxu0 0
        %828 = vmatpush.bf16.msra.mxu0 0
        %829 = vmatpush.bf16.msra.mxu0 0
        %830 = vmatpush.bf16.msra.mxu0 0
        %831 = vmatpush.bf16.msra.mxu0 0
        %832 = vmatpush.bf16.msra.mxu0 0
        %833 = vmatpush.bf16.msra.mxu0 0
        %834 = vmatpush.bf16.msra.mxu0 %v825
        %835 = vmatmul.bf16.gmra.mxu0 %v822
        %v836 = vpop.f32.mrf.mxu0
        %v837 = vadd.f32 0.0, %v836
        %v838 = vpop.f32.mrf.mxu0
        %839 = vdwg.mxu0
        %v841 = vsel %vm684, %v799, 0
        %v844 = vsel %vm804, %v674, 0
        %846 = vmatpush.bf16.msra.mxu0 0
        %847 = vmatpush.bf16.msra.mxu0 0
        %848 = vmatpush.bf16.msra.mxu0 0
        %849 = vmatpush.bf16.msra.mxu0 0
        %850 = vmatpush.bf16.msra.mxu0 0
        %851 = vmatpush.bf16.msra.mxu0 0
        %852 = vmatpush.bf16.msra.mxu0 0
        %853 = vmatpush.bf16.msra.mxu0 %v844
        %854 = vmatmul.bf16.gmra.mxu0 %v841
        %v855 = vpop.f32.mrf.mxu0
        %v856 = vadd.f32 0.0, %v855
        %v857 = vpop.f32.mrf.mxu0
        %858 = vdwg.mxu0
        %v860 = vsel %vm684, %v800, 0
        %v863 = vsel %vm804, %v677, 0
        %865 = vmatpush.bf16.msra.mxu0 0
        %866 = vmatpush.bf16.msra.mxu0 0
        %867 = vmatpush.bf16.msra.mxu0 0
        %868 = vmatpush.bf16.msra.mxu0 0
        %869 = vmatpush.bf16.msra.mxu0 0
        %870 = vmatpush.bf16.msra.mxu0 0
        %871 = vmatpush.bf16.msra.mxu0 0
        %872 = vmatpush.bf16.msra.mxu0 %v863
        %873 = vmatmul.bf16.gmra.mxu0 %v860
        %v874 = vpop.f32.mrf.mxu0
        %v875 = vadd.f32 0.0, %v874
        %v876 = vpop.f32.mrf.mxu0
        %877 = vdwg.mxu0
        %v878 = vrcp.pop %v787
        %v879 = vrcp.pop %v790
        %v880 = vrcp.pop %v793
        %v881 = vrcp.pop %v796
        %v882 = vmul.f32 %v818, %v878
        %v883 = vmul.f32 %v837, %v879
        %v884 = vmul.f32 %v856, %v880
        %v885 = vmul.f32 %v875, %v881
        %v886 = vrot.slane %v884, 4
        %vm887 = vcmask 1047556
        %v888 = vsel %vm887, %v886, %v882
        %v889 = vrot.slane %v882, 4
        %v890 = vsel %vm887, %v884, %v889
        %v892 = vunpack.c.l.s4 1983009808
        %v893 = vunpack.c.0.s8 %v892
        %v894 = vperm.slane %v888, %v893
        %v896 = vunpack.c.l.s4 1983009808
        %v897 = vunpack.c.0.s8 %v896
        %v898 = vperm.slane %v890, %v897
        %v899 = vrot.slane %v885, 4
        %v900 = vsel %vm887, %v899, %v883
        %v901 = vrot.slane %v883, 4
        %v902 = vsel %vm887, %v885, %v901
        %v904 = vunpack.c.l.s4 1983009808
        %v905 = vunpack.c.0.s8 %v904
        %v906 = vperm.slane %v900, %v905
        %v908 = vunpack.c.l.s4 1983009808
        %v909 = vunpack.c.0.s8 %v908
        %v910 = vperm.slane %v902, %v909
        %v911 = vrot.slane %v906, 4
        %v912 = vsel %vm887, %v911, %v894
        %v913 = vrot.slane %v894, 4
        %v914 = vsel %vm887, %v906, %v913
        %v916 = vunpack.c.l.s4 1934713408
        %v917 = vunpack.c.0.s8 %v916
        %v918 = vperm.slane %v912, %v917
        %v920 = vunpack.c.l.s4 1934713408
        %v921 = vunpack.c.0.s8 %v920
        %v922 = vperm.slane %v914, %v921
        %v923 = vrot.slane %v910, 4
        %v924 = vsel %vm887, %v923, %v898
        %v925 = vrot.slane %v898, 4
        %v926 = vsel %vm887, %v910, %v925
        %v928 = vunpack.c.l.s4 1934713408
        %v929 = vunpack.c.0.s8 %v928
        %v930 = vperm.slane %v924, %v929
        %v932 = vunpack.c.l.s4 1934713408
        %v933 = vunpack.c.0.s8 %v932
        %v934 = vperm.slane %v926, %v933
        %v935 = vrot.slane %v918, 4
        %v936 = vsel %vm887, 0.0, %v935
        %v937 = vrot.slane %v922, 4
        %v938 = vsel %vm887, 0.0, %v937
        %v939 = vrot.slane %v930, 4
        %v940 = vsel %vm887, 0.0, %v939
        %v941 = vrot.slane %v934, 4
        %v942 = vsel %vm887, 0.0, %v941
        %v943 = vsel %vm887, %v937, %v918
        %v945 = vunpack.c.l.s4 1983009808
        %v946 = vunpack.c.0.s8 %v945
        %v947 = vperm.slane %v943, %v946
        %v948 = vrot.slane %v938, 4
        %v949 = vsel %vm887, %v948, %v936
        %v951 = vunpack.c.l.s4 1983009808
        %v952 = vunpack.c.0.s8 %v951
        %v953 = vperm.slane %v949, %v952
        %v954 = vsel %vm887, %v941, %v930
        %v956 = vunpack.c.l.s4 1983009808
        %v957 = vunpack.c.0.s8 %v956
        %v958 = vperm.slane %v954, %v957
        %v959 = vrot.slane %v942, 4
        %v960 = vsel %vm887, %v959, %v940
        %v962 = vunpack.c.l.s4 1983009808
        %v963 = vunpack.c.0.s8 %v962
        %v964 = vperm.slane %v960, %v963
        %v965 = vrot.slane %v953, 4
        %v966 = vsel %vm887, %v965, %v947
        %v967 = vrot.slane %v947, 4
        %v968 = vsel %vm887, %v953, %v967
        %v970 = vunpack.c.l.s4 1934713408
        %v971 = vunpack.c.0.s8 %v970
        %v972 = vperm.slane %v966, %v971
        %v974 = vunpack.c.l.s4 1934713408
        %v975 = vunpack.c.0.s8 %v974
        %v976 = vperm.slane %v968, %v975
        %v977 = vrot.slane %v964, 4
        %v978 = vsel %vm887, %v977, %v958
        %v979 = vrot.slane %v958, 4
        %v980 = vsel %vm887, %v964, %v979
        %v982 = vunpack.c.l.s4 1934713408
        %v983 = vunpack.c.0.s8 %v982
        %v984 = vperm.slane %v978, %v983
        %v986 = vunpack.c.l.s4 1934713408
        %v987 = vunpack.c.0.s8 %v986
        %v988 = vperm.slane %v980, %v987
        %v989 = vrot.slane %v984, 4
        %v990 = vsel %vm887, %v989, %v972
        %v991 = vrot.slane %v972, 4
        %v992 = vsel %vm887, %v984, %v991
        %v993 = vrot.slane %v988, 4
        %v994 = vsel %vm887, %v993, %v976
        %v995 = vrot.slane %v976, 4
        %v996 = vsel %vm887, %v988, %v995
        %998 = vrot.lane.b32.xlu0 %v992, 8
        %v999 = vpop.permute.xlu0 %998
        %1002 = vrot.lane.b32.xlu0 %v994, 16
        %v1003 = vpop.permute.xlu0 %1002
        %1006 = vrot.lane.b32.xlu0 %v996, 24
        %v1007 = vpop.permute.xlu0 %1006
        %v1009 = vsel %vm684, %v990, %v999
        %vm1010 = vcmask 130048
        %v1011 = vsel %vm1010, %v1009, %v1003
        %vm1012 = vcmask 195584
        %v1013 = vsel %vm1012, %v1011, %v1007
        %v1014 = vpack.c.bf16 %v1013, %v1013
        %v1015 = vld [vmem:[#allocation7] sm:$0xf]
        %v1016 = vld [vmem:[#allocation7 + $0x4] sm:$0xf]
        %v1017 = vld [vmem:[#allocation7 + $0x8] sm:$0xf]
        %v1018 = vld [vmem:[#allocation7 + $0xc] sm:$0xf]
        %v1019 = vld [vmem:[%s3] sm:$0x1]
        %v1021 = vperm.slane %v1019, 0
        %v1027 = vunpack.c.l.b16 %v1015
        %v1028 = vunpack.c.l.b16 %v1016
        %v1029 = vunpack.c.l.b16 %v1017
        %v1030 = vunpack.c.l.b16 %v1018
        %v1031 = vpack.c.b16 %v1028, %v1027
        %v1032 = vpack.c.b16 %v1030, %v1029
        %v1036 = vsel %vm294, %v1014, 0
        %1038 = vmatpush.bf16.msra.mxu0 0
        %1039 = vmatpush.bf16.msra.mxu0 0
        %1040 = vmatpush.bf16.msra.mxu0 0
        %1041 = vmatpush.bf16.msra.mxu0 0
        %1042 = vmatpush.bf16.msra.mxu0 0
        %1043 = vmatpush.bf16.msra.mxu0 0
        %1044 = vmatpush.bf16.msra.mxu0 %v1032
        %1045 = vmatpush.bf16.msra.mxu0 %v1031
        %1046 = vmatmul.bf16.gmra.mxu0 %v1036
        %v1047 = vpop.f32.mrf.mxu0
        %v1048 = vadd.f32 %v1021, %v1047
        %v1049 = vpop.f32.mrf.mxu0
        %1050 = vdwg.mxu0
        %v1051 = vsel %vm294, %v1048, 0.0
        %1052 = vadd.xlane.f32.xlu0 %v1051
        %v1053 = vpop.xlane.xlu0 %1052
        %v1054 = vrcp.pop 32.0
        %v1055 = vmul.f32 32.0, %v1054
        %v1056 = vsub.f32 1.0, %v1055
        %v1057 = vmul.f32 %v1054, %v1056
        %v1058 = vadd.f32 %v1054, %v1057
        %vm1059 = vweird.f32 %v1054
        %v1060 = vsel %vm1059, %v1054, %v1058
        %v1061 = vmul.f32 %v1053, %v1060
        %v1062 = vsub.f32 %v1048, %v1061
        %v1063 = vmul.f32 %v1062, %v1062
        %v1064 = vsel %vm294, %v1063, 0.0
        %1065 = vadd.xlane.f32.xlu0 %v1064
        %v1066 = vpop.xlane.xlu0 %1065
        %v1067 = vmul.f32 %v1066, %v1060
        %v1068 = vadd.f32 %v1067, 1e-05
        %v1069 = vrsqrt.pop %v1068
        %v1070 = vmul.f32 %v1069, %v1068
        %v1071 = vmul.f32 %v1070, %v1069
        %v1072 = vmul.f32 0.5, %v1071
        %v1073 = vsub.f32 1.5, %v1072
        %v1074 = vmul.f32 %v1069, %v1073
        %vm1075 = vweird.f32 %v1068
        %vm1076 = vweird.f32 %v1069
        %vm1077 = vmor %vm1075, %vm1076
        %v1078 = vsel %vm1077, %v1069, %v1074
        %v1079 = vmul.f32 %v1062, %v1078
        %v1080 = vld [vmem:[%s4] sm:$0x1]
        %v1082 = vperm.slane %v1080, 0
        %v1084 = vmul.f32 %v1079, %v1082
        %1085 = vst.msk [vmem:[%s274] sm:$0xff] %vm294, %v1084
        %s1086 = sand.u32 %s141, 1
        %s1087 = scalar_lea.sflag [#allocation4], %s1086
        %s1088 = sand.u32 %s141, 1
        %s1089 = smul.addr %s1088, 8
        %s1090 = scalar_lea.vmem [#allocation8], %s1089
        // Predicated region
        $region53: #{multi_head_attention.1} parent=39 // pred_check
          %p1091 = pneg %p151
        $region54: #{multi_head_attention.1} parent=39 // pred_check_branch
          %1093 = sbr.rel (%p1091) target = $region56
        $region55: #{multi_head_attention.1} parent=39 // pred_region
          %1095 = vsyncadd %s1087, 0
          %s1096 = smul.addr %s23, 8
          %s1097 = scalar_lea.hbm %s5, %s1096
          %s1099 = sshll.u32 %s1090, 4
          %s1100 = int_to_ptr.vmem [resolvable:$true] %s1099
          %s1101 = sshll.u32 %s1097, 4
          %s1102 = int_to_ptr.hbm [resolvable:$true] %s1101
          %1104 = dma.vmem_to_hbm [thread:$0]  %s1100, 128, %s1102, %s1087
        $region56: #{multi_head_attention.1} parent=39 // pred_fallthru
          _
      $region40: #{multi_head_attention.1} parent=5 // pred_fallthru
        _
      %p1105 = scmp.le.s32.totalorder 2, %s18
      // Predicated region
      $region57: #{multi_head_attention.1} parent=5 // pred_check
        %p1106 = pneg %p1105
      $region58: #{multi_head_attention.1} parent=5 // pred_check_branch
        %1108 = sbr.rel (%p1106) target = $region60
      $region59: #{multi_head_attention.1} parent=5 // pred_region
        %s1109 = ssub.s32 %s18, 2
        // Predicated region
        $region61: #{multi_head_attention.1} parent=59 // pred_check
          %p1110 = pneg %p157
        $region62: #{multi_head_attention.1} parent=59 // pred_check_branch
          %1112 = sbr.rel (%p1110) target = $region64
        $region63: #{multi_head_attention.1} parent=59 // pred_region
          %s1113 = sand.u32 %s142, 1
          %s1114 = scalar_lea.sflag [#allocation4], %s1113
          %s1115 = sand.u32 %s142, 1
          %s1116 = smul.addr %s1115, 8
          %s1117 = scalar_lea.vmem [#allocation8], %s1116
          %1119 = dma.done %s1114, 128
        $region64: #{multi_head_attention.1} parent=59 // pred_fallthru
          _
      $region60: #{multi_head_attention.1} parent=5 // pred_fallthru
        _
    $region6: #{multi_head_attention.1} parent=1 // loop_footer
      %s22 = sadd.s32 1, %s18
    $region7: #{multi_head_attention.1} parent=1 // loop_footer_branch
      %17 = sbr.rel target = $region3
    $region8: #{multi_head_attention.1} parent=1 // loop_exit
      _
    %1120 = vsyncpa [#allocation3], 1
    %s1121 = scalar_lea.sflag [#allocation3], 1
    %1122 = vsyncpa %s1121, 1
    %1123 = vsyncpa [#allocation6], 1
    %1124 = vsyncpa [#allocation4], 1
    %s1125 = scalar_lea.sflag [#allocation4], 1
    %1126 = vsyncpa %s1125, 1

</llo_original>
